<compile_context>
chip_gen: v6e
topology: v6e:2x2x1
jax: 0.10.0
libtpu: 0.0.40
codegen_flags: <defaults>
</compile_context>

<pallas_src>
import jax
import jax.numpy as jnp
from jax.experimental import pallas as pl
from jax.experimental.pallas import tpu as pltpu

IN_FEATURES = 784
OUT_FEATURES = 10


def _round_up(n, m):
    return ((n + m - 1) // m) * m


def linear_kernel(x_ref, w_ref, b_ref, o_ref):
    # x_ref: (TB, 784) tile of the batch (streamed, double-buffered)
    # w_ref: (784, 10) resident across all grid steps
    # b_ref: (1, 10)   resident across all grid steps
    y = jnp.dot(x_ref[...], w_ref[...],
                preferred_element_type=jnp.float32)   # MXU, f32 accumulation
    o_ref[...] = (y + b_ref[...]).astype(o_ref.dtype)


def logistic_regression_forward(x, weight, bias, *, block_b=1024):
    """x: anything reshapeable to (-1, 784); weight: (784, 10); bias: (10,).

    Operands are streamed at the dtype they arrive in (cast weights to bf16 at
    model-load time if you want the half-bandwidth path; do NOT cast per call).
    Accumulation is always f32 and the output is f32.
    """
    x2d = x.reshape(-1, IN_FEATURES)                  # mirrors x.view(-1, 784)
    B = x2d.shape[0]
    b2d = bias.astype(jnp.float32).reshape(1, OUT_FEATURES)

    # Batch tile: multiple of 8 (sublane rule). If the whole batch fits in one
    # block, split it into >=2 grid steps so both v7x TensorCores engage.
    if B <= block_b:
        tb = max(8, _round_up(pl.cdiv(B, 2), 8))
    else:
        tb = block_b
    grid_b = pl.cdiv(B, tb)                           # ragged last block is OK

    x_bytes = jnp.dtype(x2d.dtype).itemsize
    w_bytes = jnp.dtype(weight.dtype).itemsize

    # Scoped VMEM: double-buffered x tile + double-buffered (lane-padded) out
    # tile + resident lane-padded W + bias + slack.
    vmem_bytes = (2 * tb * IN_FEATURES * x_bytes
                  + 2 * tb * 128 * 4
                  + IN_FEATURES * 128 * w_bytes
                  + 8 * 128 * 4
                  + 4 * 1024 * 1024)
    vmem_bytes = int(max(vmem_bytes, 16 * 1024 * 1024))

    cost = pl.CostEstimate(
        flops=2 * B * IN_FEATURES * OUT_FEATURES,
        transcendentals=0,
        bytes_accessed=(B * IN_FEATURES * x_bytes
                        + IN_FEATURES * OUT_FEATURES * w_bytes
                        + OUT_FEATURES * 4
                        + B * OUT_FEATURES * 4),
    )

    return pl.pallas_call(
        linear_kernel,
        out_shape=jax.ShapeDtypeStruct((B, OUT_FEATURES), jnp.float32),
        grid_spec=pltpu.PrefetchScalarGridSpec(
            num_scalar_prefetch=0,
            grid=(grid_b,),
            in_specs=[
                pl.BlockSpec((tb, IN_FEATURES), lambda i: (i, 0)),
                pl.BlockSpec((IN_FEATURES, OUT_FEATURES), lambda i: (0, 0)),
                pl.BlockSpec((1, OUT_FEATURES), lambda i: (0, 0)),
            ],
            out_specs=pl.BlockSpec((tb, OUT_FEATURES), lambda i: (i, 0)),
        ),
        compiler_params=pltpu.CompilerParams(
            dimension_semantics=("parallel",),
            vmem_limit_bytes=vmem_bytes),
        cost_estimate=cost,
    )(x2d, weight, b2d)


if __name__ == "__main__":
    key = jax.random.PRNGKey(0)
    kx, kw, kb, kx2 = jax.random.split(key, 4)

    # Deterministic parameter init (uniform like torch.nn.Linear's default).
    bound = 1.0 / (IN_FEATURES ** 0.5)
    weight = jax.random.uniform(
        kw, (IN_FEATURES, OUT_FEATURES), jnp.float32, -bound, bound)
    bias = jax.random.uniform(kb, (OUT_FEATURES,), jnp.float32, -bound, bound)

    # Small MNIST-like batch; forward does x.view(-1, 784).
    x = jax.random.normal(kx, (8, 1, 28, 28), jnp.float32)
    y = logistic_regression_forward(x, weight, bias)
    jax.block_until_ready(y)
    y_ref = x.reshape(-1, IN_FEATURES) @ weight + bias
    assert y.shape == (8, OUT_FEATURES)
    assert jnp.allclose(y, y_ref, atol=1e-4, rtol=1e-4)

    # Ragged batch (not a multiple of 8 nor of the tile): exercises the
    # partial last block (no wrapper pad/slice) and the >=2-step grid split.
    xb = jax.random.normal(kx2, (270, IN_FEATURES), jnp.float32)
    yb = logistic_regression_forward(xb, weight, bias)
    jax.block_until_ready(yb)
    yb_ref = xb @ weight + bias
    assert yb.shape == (270, OUT_FEATURES)
    assert jnp.allclose(yb, yb_ref, atol=1e-4, rtol=1e-4)

    # bf16-upstream path: operands already live in bf16 (simulated here); the
    # wrapper performs no cast, accumulation stays f32.
    x16 = xb.astype(jnp.bfloat16)
    w16 = weight.astype(jnp.bfloat16)
    y16 = logistic_regression_forward(x16, w16, bias)
    jax.block_until_ready(y16)
    assert jnp.allclose(y16, yb_ref, atol=5e-2, rtol=5e-2)

    print("KERNEL_OK")
</pallas_src>

<mosaic_0001>
module attributes {stable_mosaic.version = 11 : i64} {
  func.func @linear_kernel(%arg0: i32, %arg1: memref<8x784xf32, #tpu.memory_space<vmem>>, %arg2: memref<784x10xf32, #tpu.memory_space<vmem>>, %arg3: memref<1x10xf32, #tpu.memory_space<vmem>>, %arg4: memref<8x10xf32, #tpu.memory_space<vmem>>) attributes {dimension_semantics = [#tpu.dimension_semantics<parallel>], iteration_bounds = array<i64: 1>, scalar_prefetch = 0 : i64, scratch_operands = 0 : i64, tpu.core_type = #tpu.core_type<tc>, window_params = [{transform_indices = @transform_0, window_bounds = array<i64: 8, 784>}, {pipeline_mode = #tpu.pipeline_mode<synchronous>, transform_indices = @transform_1, window_bounds = array<i64: 784, 10>}, {pipeline_mode = #tpu.pipeline_mode<synchronous>, transform_indices = @transform_2, window_bounds = array<i64: 1, 10>}, {transform_indices = @transform_3, window_bounds = array<i64: 8, 10>}]} {
    %c0 = arith.constant 0 : index
    %c0_0 = arith.constant 0 : index
    %0 = vector.load %arg1[%c0, %c0_0] : memref<8x784xf32, #tpu.memory_space<vmem>>, vector<8x784xf32>
    %c0_1 = arith.constant 0 : index
    %c0_2 = arith.constant 0 : index
    %1 = vector.load %arg2[%c0_1, %c0_2] : memref<784x10xf32, #tpu.memory_space<vmem>>, vector<784x10xf32>
    %cst = arith.constant dense<0.000000e+00> : vector<8x10xf32>
    %2 = tpu.matmul %0, %1, %cst {dimension_numbers = #tpu.dot_dimension_numbers<[1], [0], [0], [1], [0, 0, 1, 1], [], []>} : vector<8x784xf32>, vector<784x10xf32>, vector<8x10xf32> -> vector<8x10xf32>
    %c0_3 = arith.constant 0 : index
    %c0_4 = arith.constant 0 : index
    %3 = vector.load %arg3[%c0_3, %c0_4] : memref<1x10xf32, #tpu.memory_space<vmem>>, vector<1x10xf32>
    %4 = vector.broadcast %3 : vector<1x10xf32> to vector<8x10xf32>
    %5 = arith.addf %2, %4 : vector<8x10xf32>
    %c0_5 = arith.constant 0 : index
    %c0_6 = arith.constant 0 : index
    %6 = vector.load %arg4[%c0_5, %c0_6] : memref<8x10xf32, #tpu.memory_space<vmem>>, vector<8x10xf32>
    tpu.vector_store %arg4[%c0_5, %c0_6], %5 {strides = array<i32>} : memref<8x10xf32, #tpu.memory_space<vmem>>, vector<8x10xf32>,
    return
  }
  func.func @transform_0(%arg0: i32) -> (i32, i32) {
    %c0_i32 = arith.constant 0 : i32
    %c0_i32_0 = arith.constant 0 : i32
    return %arg0, %c0_i32 : i32, i32
  }
  func.func @transform_1(%arg0: i32) -> (i32, i32) {
    %c0_i32 = arith.constant 0 : i32
    %c0_i32_0 = arith.constant 0 : i32
    %c0_i32_1 = arith.constant 0 : i32
    return %c0_i32, %c0_i32_0 : i32, i32
  }
  func.func @transform_2(%arg0: i32) -> (i32, i32) {
    %c0_i32 = arith.constant 0 : i32
    %c0_i32_0 = arith.constant 0 : i32
    %c0_i32_1 = arith.constant 0 : i32
    return %c0_i32, %c0_i32_0 : i32, i32
  }
  func.func @transform_3(%arg0: i32) -> (i32, i32) {
    %c0_i32 = arith.constant 0 : i32
    %c0_i32_0 = arith.constant 0 : i32
    return %arg0, %c0_i32 : i32, i32
  }
}

</mosaic_0001>

<llo_original>
// kernel: tpu_custom_call.1
$region0: #{tpu_custom_call.1}
  #allocation0 [shape = 'u32[]', space=smem, size = 0x4, offset = 0x4, fixed_abs, tag = 'smem constant byte address 0x4 - core index']
  #allocation1 [shape = 'u32[144,128]{1,0:T(1,128)}', space=vmem, size = 0x12000, scoped, tag = 'internal scratch']
  %s0 = inlined_call_operand.vmem [shape: f32[8,784], index: 0, kind: input, shape index: {}]
  %s1 = inlined_call_operand.vmem [shape: f32[784,10], index: 1, kind: input, shape index: {}]
  %s2 = inlined_call_operand.vmem [shape: f32[1,10], index: 2, kind: input, shape index: {}]
  %s3 = inlined_call_operand.hbm [shape: f32[8,10], index: 3, kind: output, shape index: {}]
  %s4 = sld [smem:[#allocation0]]
  $region22: #{tpu_custom_call.1} parent=0
    _
  %s6 = ssub.s32 1, %s4
  %s7 = scalar_select 0, %s6, %s4
  $region1: #{tpu_custom_call.1} parent=0
    #allocation2 [shape = 'u8[4096]{0}', space=vmem, size = 0x1000, scoped, tag = 'output window, operand 0, single buffered']
    #allocation3 [shape = 's32[1]{0}', space=sflag, size = 0x4, scoped, tag = 'scoped memory for tpu_custom_call.1']
    %8 = vsyncpa [#allocation3], 0
    // Predicated region
    $region2: #{tpu_custom_call.1} parent=1 // pred_check
      _
    $region3: #{tpu_custom_call.1} parent=1 // pred_check_branch
      %10 = sbr.rel (0) target = $region5
    $region4: #{tpu_custom_call.1} parent=1 // pred_region
      _
    $region5: #{tpu_custom_call.1} parent=1 // pred_fallthru
      _
    // Predicated region
    $region6: #{tpu_custom_call.1} parent=1 // pred_check
      _
    $region7: #{tpu_custom_call.1} parent=1 // pred_check_branch
      %12 = sbr.rel (0) target = $region9
    $region8: #{tpu_custom_call.1} parent=1 // pred_region
      _
    $region9: #{tpu_custom_call.1} parent=1 // pred_fallthru
      _
    // Predicated region
    $region10: #{tpu_custom_call.1} parent=1 // pred_check
      _
    $region11: #{tpu_custom_call.1} parent=1 // pred_check_branch
      %14 = sbr.rel (0) target = $region13
    $region12: #{tpu_custom_call.1} parent=1 // pred_region
      _
    $region13: #{tpu_custom_call.1} parent=1 // pred_fallthru
      _
    %v15 = vld [vmem:[%s0] sm:$0xff]
    %v16 = vld [vmem:[%s0 + $0x8] sm:$0xff]
    %v17 = vld [vmem:[%s0 + $0x10] sm:$0xff]
    %v18 = vld [vmem:[%s0 + $0x18] sm:$0xff]
    %v19 = vld [vmem:[%s0 + $0x20] sm:$0xff]
    %v20 = vld [vmem:[%s0 + $0x28] sm:$0xff]
    %v21 = vld [vmem:[%s0 + $0x30] sm:$0xff]
    %v22 = vld [vmem:[%s1] sm:$0xff]
    %v23 = vld [vmem:[%s1 + $0x8] sm:$0xff]
    %v24 = vld [vmem:[%s1 + $0x10] sm:$0xff]
    %v25 = vld [vmem:[%s1 + $0x18] sm:$0xff]
    %v26 = vld [vmem:[%s1 + $0x20] sm:$0xff]
    %v27 = vld [vmem:[%s1 + $0x28] sm:$0xff]
    %v28 = vld [vmem:[%s1 + $0x30] sm:$0xff]
    %v29 = vld [vmem:[%s1 + $0x38] sm:$0xff]
    %v30 = vld [vmem:[%s1 + $0x40] sm:$0xff]
    %v31 = vld [vmem:[%s1 + $0x48] sm:$0xff]
    %v32 = vld [vmem:[%s1 + $0x50] sm:$0xff]
    %v33 = vld [vmem:[%s1 + $0x58] sm:$0xff]
    %v34 = vld [vmem:[%s1 + $0x60] sm:$0xff]
    %v35 = vld [vmem:[%s1 + $0x68] sm:$0xff]
    %v36 = vld [vmem:[%s1 + $0x70] sm:$0xff]
    %v37 = vld [vmem:[%s1 + $0x78] sm:$0xff]
    %v38 = vld [vmem:[%s1 + $0x80] sm:$0xff]
    %v39 = vld [vmem:[%s1 + $0x88] sm:$0xff]
    %v40 = vld [vmem:[%s1 + $0x90] sm:$0xff]
    %v41 = vld [vmem:[%s1 + $0x98] sm:$0xff]
    %v42 = vld [vmem:[%s1 + $0xa0] sm:$0xff]
    %v43 = vld [vmem:[%s1 + $0xa8] sm:$0xff]
    %v44 = vld [vmem:[%s1 + $0xb0] sm:$0xff]
    %v45 = vld [vmem:[%s1 + $0xb8] sm:$0xff]
    %v46 = vld [vmem:[%s1 + $0xc0] sm:$0xff]
    %v47 = vld [vmem:[%s1 + $0xc8] sm:$0xff]
    %v48 = vld [vmem:[%s1 + $0xd0] sm:$0xff]
    %v49 = vld [vmem:[%s1 + $0xd8] sm:$0xff]
    %v50 = vld [vmem:[%s1 + $0xe0] sm:$0xff]
    %v51 = vld [vmem:[%s1 + $0xe8] sm:$0xff]
    %v52 = vld [vmem:[%s1 + $0xf0] sm:$0xff]
    %v53 = vld [vmem:[%s1 + $0xf8] sm:$0xff]
    %v54 = vld [vmem:[%s1 + $0x100] sm:$0xff]
    %v55 = vld [vmem:[%s1 + $0x108] sm:$0xff]
    %v56 = vld [vmem:[%s1 + $0x110] sm:$0xff]
    %v57 = vld [vmem:[%s1 + $0x118] sm:$0xff]
    %v58 = vld [vmem:[%s1 + $0x120] sm:$0xff]
    %v59 = vld [vmem:[%s1 + $0x128] sm:$0xff]
    %v60 = vld [vmem:[%s1 + $0x130] sm:$0xff]
    %v61 = vld [vmem:[%s1 + $0x138] sm:$0xff]
    %v62 = vld [vmem:[%s1 + $0x140] sm:$0xff]
    %v63 = vld [vmem:[%s1 + $0x148] sm:$0xff]
    %v64 = vld [vmem:[%s1 + $0x150] sm:$0xff]
    %v65 = vld [vmem:[%s1 + $0x158] sm:$0xff]
    %v66 = vld [vmem:[%s1 + $0x160] sm:$0xff]
    %v67 = vld [vmem:[%s1 + $0x168] sm:$0xff]
    %v68 = vld [vmem:[%s1 + $0x170] sm:$0xff]
    %v69 = vld [vmem:[%s1 + $0x178] sm:$0xff]
    %v70 = vld [vmem:[%s1 + $0x180] sm:$0xff]
    %v71 = vld [vmem:[%s1 + $0x188] sm:$0xff]
    %v72 = vld [vmem:[%s1 + $0x190] sm:$0xff]
    %v73 = vld [vmem:[%s1 + $0x198] sm:$0xff]
    %v74 = vld [vmem:[%s1 + $0x1a0] sm:$0xff]
    %v75 = vld [vmem:[%s1 + $0x1a8] sm:$0xff]
    %v76 = vld [vmem:[%s1 + $0x1b0] sm:$0xff]
    %v77 = vld [vmem:[%s1 + $0x1b8] sm:$0xff]
    %v78 = vld [vmem:[%s1 + $0x1c0] sm:$0xff]
    %v79 = vld [vmem:[%s1 + $0x1c8] sm:$0xff]
    %v80 = vld [vmem:[%s1 + $0x1d0] sm:$0xff]
    %v81 = vld [vmem:[%s1 + $0x1d8] sm:$0xff]
    %v82 = vld [vmem:[%s1 + $0x1e0] sm:$0xff]
    %v83 = vld [vmem:[%s1 + $0x1e8] sm:$0xff]
    %v84 = vld [vmem:[%s1 + $0x1f0] sm:$0xff]
    %v85 = vld [vmem:[%s1 + $0x1f8] sm:$0xff]
    %v86 = vld [vmem:[%s1 + $0x200] sm:$0xff]
    %v87 = vld [vmem:[%s1 + $0x208] sm:$0xff]
    %v88 = vld [vmem:[%s1 + $0x210] sm:$0xff]
    %v89 = vld [vmem:[%s1 + $0x218] sm:$0xff]
    %v90 = vld [vmem:[%s1 + $0x220] sm:$0xff]
    %v91 = vld [vmem:[%s1 + $0x228] sm:$0xff]
    %v92 = vld [vmem:[%s1 + $0x230] sm:$0xff]
    %v93 = vld [vmem:[%s1 + $0x238] sm:$0xff]
    %v94 = vld [vmem:[%s1 + $0x240] sm:$0xff]
    %v95 = vld [vmem:[%s1 + $0x248] sm:$0xff]
    %v96 = vld [vmem:[%s1 + $0x250] sm:$0xff]
    %v97 = vld [vmem:[%s1 + $0x258] sm:$0xff]
    %v98 = vld [vmem:[%s1 + $0x260] sm:$0xff]
    %v99 = vld [vmem:[%s1 + $0x268] sm:$0xff]
    %v100 = vld [vmem:[%s1 + $0x270] sm:$0xff]
    %v101 = vld [vmem:[%s1 + $0x278] sm:$0xff]
    %v102 = vld [vmem:[%s1 + $0x280] sm:$0xff]
    %v103 = vld [vmem:[%s1 + $0x288] sm:$0xff]
    %v104 = vld [vmem:[%s1 + $0x290] sm:$0xff]
    %v105 = vld [vmem:[%s1 + $0x298] sm:$0xff]
    %v106 = vld [vmem:[%s1 + $0x2a0] sm:$0xff]
    %v107 = vld [vmem:[%s1 + $0x2a8] sm:$0xff]
    %v108 = vld [vmem:[%s1 + $0x2b0] sm:$0xff]
    %v109 = vld [vmem:[%s1 + $0x2b8] sm:$0xff]
    %v110 = vld [vmem:[%s1 + $0x2c0] sm:$0xff]
    %v111 = vld [vmem:[%s1 + $0x2c8] sm:$0xff]
    %v112 = vld [vmem:[%s1 + $0x2d0] sm:$0xff]
    %v113 = vld [vmem:[%s1 + $0x2d8] sm:$0xff]
    %v114 = vld [vmem:[%s1 + $0x2e0] sm:$0xff]
    %v115 = vld [vmem:[%s1 + $0x2e8] sm:$0xff]
    %v116 = vld [vmem:[%s1 + $0x2f0] sm:$0xff]
    %v117 = vld [vmem:[%s1 + $0x2f8] sm:$0xff]
    %v118 = vld [vmem:[%s1 + $0x300] sm:$0xff]
    %v119 = vld [vmem:[%s1 + $0x308] sm:$0xff]
    %v120 = vld [vmem:[%s2] sm:$0x1]
    %v122 = vlaneseq
    %v123 = vshrl.u32 %v122, 7
    %v124 = vsub.s32 0, %v123
    %v125 = vrot.slane %v120, %v124
    %vm127 = vcmask 130048
    %v129 = vsel %vm127, %v21, 0
    %131 = vmatprep.subr.mxu0 0.0
    %132 = vmatpush1.msra.mxu0 %v37
    %133 = vmatprep.subr.mxu0 0.0
    %134 = vmatpush1.msra.mxu0 %v36
    %135 = vmatprep.subr.mxu0 0.0
    %136 = vmatpush1.msra.mxu0 %v35
    %137 = vmatprep.subr.mxu0 0.0
    %138 = vmatpush1.msra.mxu0 %v34
    %139 = vmatprep.subr.mxu0 0.0
    %140 = vmatpush1.msra.mxu0 %v33
    %141 = vmatprep.subr.mxu0 0.0
    %142 = vmatpush1.msra.mxu0 %v32
    %143 = vmatprep.subr.mxu0 0.0
    %144 = vmatpush1.msra.mxu0 %v31
    %145 = vmatprep.subr.mxu0 0.0
    %146 = vmatpush1.msra.mxu0 %v30
    %147 = vmatprep.subr.mxu0 0.0
    %148 = vmatpush1.msra.mxu0 %v29
    %149 = vmatprep.subr.mxu0 0.0
    %150 = vmatpush1.msra.mxu0 %v28
    %151 = vmatprep.subr.mxu0 0.0
    %152 = vmatpush1.msra.mxu0 %v27
    %153 = vmatprep.subr.mxu0 0.0
    %154 = vmatpush1.msra.mxu0 %v26
    %155 = vmatprep.subr.mxu0 0.0
    %156 = vmatpush1.msra.mxu0 %v25
    %157 = vmatprep.subr.mxu0 0.0
    %158 = vmatpush1.msra.mxu0 %v24
    %159 = vmatprep.subr.mxu0 0.0
    %160 = vmatpush1.msra.mxu0 %v23
    %161 = vmatprep.subr.mxu0 0.0
    %162 = vmatpush1.msra.mxu0 %v22
    %163 = vmatprep.subr.mxu0 0.0
    %164 = vmatpush2.msra.mxu0 %v53
    %165 = vmatprep.subr.mxu0 0.0
    %166 = vmatpush2.msra.mxu0 %v52
    %167 = vmatprep.subr.mxu0 0.0
    %168 = vmatpush2.msra.mxu0 %v51
    %169 = vmatprep.subr.mxu0 0.0
    %170 = vmatpush2.msra.mxu0 %v50
    %171 = vmatprep.subr.mxu0 0.0
    %172 = vmatpush2.msra.mxu0 %v49
    %173 = vmatprep.subr.mxu0 0.0
    %174 = vmatpush2.msra.mxu0 %v48
    %175 = vmatprep.subr.mxu0 0.0
    %176 = vmatpush2.msra.mxu0 %v47
    %177 = vmatprep.subr.mxu0 0.0
    %178 = vmatpush2.msra.mxu0 %v46
    %179 = vmatprep.subr.mxu0 0.0
    %180 = vmatpush2.msra.mxu0 %v45
    %181 = vmatprep.subr.mxu0 0.0
    %182 = vmatpush2.msra.mxu0 %v44
    %183 = vmatprep.subr.mxu0 0.0
    %184 = vmatpush2.msra.mxu0 %v43
    %185 = vmatprep.subr.mxu0 0.0
    %186 = vmatpush2.msra.mxu0 %v42
    %187 = vmatprep.subr.mxu0 0.0
    %188 = vmatpush2.msra.mxu0 %v41
    %189 = vmatprep.subr.mxu0 0.0
    %190 = vmatpush2.msra.mxu0 %v40
    %191 = vmatprep.subr.mxu0 0.0
    %192 = vmatpush2.msra.mxu0 %v39
    %193 = vmatprep.subr.mxu0 0.0
    %194 = vmatpush2.msra.mxu0 %v38
    %195 = vmatprep.mubr.f32.mxu0 %v16
    %196 = vmatmul.mubr.f32.gmra.mxu0 %v15
    %v197 = vpop.f32.mrf.mxu0
    %v198 = vadd.f32 %v125, %v197
    %v199 = vpop.f32.mrf.mxu0
    %200 = vdwg.mxu0
    %201 = vmatprep.subr.mxu0 0.0
    %202 = vmatpush1.msra.mxu0 %v69
    %203 = vmatprep.subr.mxu0 0.0
    %204 = vmatpush1.msra.mxu0 %v68
    %205 = vmatprep.subr.mxu0 0.0
    %206 = vmatpush1.msra.mxu0 %v67
    %207 = vmatprep.subr.mxu0 0.0
    %208 = vmatpush1.msra.mxu0 %v66
    %209 = vmatprep.subr.mxu0 0.0
    %210 = vmatpush1.msra.mxu0 %v65
    %211 = vmatprep.subr.mxu0 0.0
    %212 = vmatpush1.msra.mxu0 %v64
    %213 = vmatprep.subr.mxu0 0.0
    %214 = vmatpush1.msra.mxu0 %v63
    %215 = vmatprep.subr.mxu0 0.0
    %216 = vmatpush1.msra.mxu0 %v62
    %217 = vmatprep.subr.mxu0 0.0
    %218 = vmatpush1.msra.mxu0 %v61
    %219 = vmatprep.subr.mxu0 0.0
    %220 = vmatpush1.msra.mxu0 %v60
    %221 = vmatprep.subr.mxu0 0.0
    %222 = vmatpush1.msra.mxu0 %v59
    %223 = vmatprep.subr.mxu0 0.0
    %224 = vmatpush1.msra.mxu0 %v58
    %225 = vmatprep.subr.mxu0 0.0
    %226 = vmatpush1.msra.mxu0 %v57
    %227 = vmatprep.subr.mxu0 0.0
    %228 = vmatpush1.msra.mxu0 %v56
    %229 = vmatprep.subr.mxu0 0.0
    %230 = vmatpush1.msra.mxu0 %v55
    %231 = vmatprep.subr.mxu0 0.0
    %232 = vmatpush1.msra.mxu0 %v54
    %233 = vmatprep.subr.mxu0 0.0
    %234 = vmatpush2.msra.mxu0 %v85
    %235 = vmatprep.subr.mxu0 0.0
    %236 = vmatpush2.msra.mxu0 %v84
    %237 = vmatprep.subr.mxu0 0.0
    %238 = vmatpush2.msra.mxu0 %v83
    %239 = vmatprep.subr.mxu0 0.0
    %240 = vmatpush2.msra.mxu0 %v82
    %241 = vmatprep.subr.mxu0 0.0
    %242 = vmatpush2.msra.mxu0 %v81
    %243 = vmatprep.subr.mxu0 0.0
    %244 = vmatpush2.msra.mxu0 %v80
    %245 = vmatprep.subr.mxu0 0.0
    %246 = vmatpush2.msra.mxu0 %v79
    %247 = vmatprep.subr.mxu0 0.0
    %248 = vmatpush2.msra.mxu0 %v78
    %249 = vmatprep.subr.mxu0 0.0
    %250 = vmatpush2.msra.mxu0 %v77
    %251 = vmatprep.subr.mxu0 0.0
    %252 = vmatpush2.msra.mxu0 %v76
    %253 = vmatprep.subr.mxu0 0.0
    %254 = vmatpush2.msra.mxu0 %v75
    %255 = vmatprep.subr.mxu0 0.0
    %256 = vmatpush2.msra.mxu0 %v74
    %257 = vmatprep.subr.mxu0 0.0
    %258 = vmatpush2.msra.mxu0 %v73
    %259 = vmatprep.subr.mxu0 0.0
    %260 = vmatpush2.msra.mxu0 %v72
    %261 = vmatprep.subr.mxu0 0.0
    %262 = vmatpush2.msra.mxu0 %v71
    %263 = vmatprep.subr.mxu0 0.0
    %264 = vmatpush2.msra.mxu0 %v70
    %265 = vmatprep.mubr.f32.mxu0 %v18
    %266 = vmatmul.mubr.f32.gmra.mxu0 %v17
    %v267 = vpop.f32.mrf.mxu0
    %v268 = vadd.f32 %v198, %v267
    %v269 = vpop.f32.mrf.mxu0
    %270 = vdwg.mxu0
    %271 = vmatprep.subr.mxu0 0.0
    %272 = vmatpush1.msra.mxu0 %v101
    %273 = vmatprep.subr.mxu0 0.0
    %274 = vmatpush1.msra.mxu0 %v100
    %275 = vmatprep.subr.mxu0 0.0
    %276 = vmatpush1.msra.mxu0 %v99
    %277 = vmatprep.subr.mxu0 0.0
    %278 = vmatpush1.msra.mxu0 %v98
    %279 = vmatprep.subr.mxu0 0.0
    %280 = vmatpush1.msra.mxu0 %v97
    %281 = vmatprep.subr.mxu0 0.0
    %282 = vmatpush1.msra.mxu0 %v96
    %283 = vmatprep.subr.mxu0 0.0
    %284 = vmatpush1.msra.mxu0 %v95
    %285 = vmatprep.subr.mxu0 0.0
    %286 = vmatpush1.msra.mxu0 %v94
    %287 = vmatprep.subr.mxu0 0.0
    %288 = vmatpush1.msra.mxu0 %v93
    %289 = vmatprep.subr.mxu0 0.0
    %290 = vmatpush1.msra.mxu0 %v92
    %291 = vmatprep.subr.mxu0 0.0
    %292 = vmatpush1.msra.mxu0 %v91
    %293 = vmatprep.subr.mxu0 0.0
    %294 = vmatpush1.msra.mxu0 %v90
    %295 = vmatprep.subr.mxu0 0.0
    %296 = vmatpush1.msra.mxu0 %v89
    %297 = vmatprep.subr.mxu0 0.0
    %298 = vmatpush1.msra.mxu0 %v88
    %299 = vmatprep.subr.mxu0 0.0
    %300 = vmatpush1.msra.mxu0 %v87
    %301 = vmatprep.subr.mxu0 0.0
    %302 = vmatpush1.msra.mxu0 %v86
    %303 = vmatprep.subr.mxu0 0.0
    %304 = vmatpush2.msra.mxu0 %v117
    %305 = vmatprep.subr.mxu0 0.0
    %306 = vmatpush2.msra.mxu0 %v116
    %307 = vmatprep.subr.mxu0 0.0
    %308 = vmatpush2.msra.mxu0 %v115
    %309 = vmatprep.subr.mxu0 0.0
    %310 = vmatpush2.msra.mxu0 %v114
    %311 = vmatprep.subr.mxu0 0.0
    %312 = vmatpush2.msra.mxu0 %v113
    %313 = vmatprep.subr.mxu0 0.0
    %314 = vmatpush2.msra.mxu0 %v112
    %315 = vmatprep.subr.mxu0 0.0
    %316 = vmatpush2.msra.mxu0 %v111
    %317 = vmatprep.subr.mxu0 0.0
    %318 = vmatpush2.msra.mxu0 %v110
    %319 = vmatprep.subr.mxu0 0.0
    %320 = vmatpush2.msra.mxu0 %v109
    %321 = vmatprep.subr.mxu0 0.0
    %322 = vmatpush2.msra.mxu0 %v108
    %323 = vmatprep.subr.mxu0 0.0
    %324 = vmatpush2.msra.mxu0 %v107
    %325 = vmatprep.subr.mxu0 0.0
    %326 = vmatpush2.msra.mxu0 %v106
    %327 = vmatprep.subr.mxu0 0.0
    %328 = vmatpush2.msra.mxu0 %v105
    %329 = vmatprep.subr.mxu0 0.0
    %330 = vmatpush2.msra.mxu0 %v104
    %331 = vmatprep.subr.mxu0 0.0
    %332 = vmatpush2.msra.mxu0 %v103
    %333 = vmatprep.subr.mxu0 0.0
    %334 = vmatpush2.msra.mxu0 %v102
    %335 = vmatprep.mubr.f32.mxu0 %v20
    %336 = vmatmul.mubr.f32.gmra.mxu0 %v19
    %v337 = vpop.f32.mrf.mxu0
    %v338 = vadd.f32 %v268, %v337
    %v339 = vpop.f32.mrf.mxu0
    %340 = vdwg.mxu0
    %341 = vmatprep.subr.mxu0 0.0
    %342 = vmatpush1.msra.mxu0 0.0
    %343 = vmatprep.subr.mxu0 0.0
    %344 = vmatpush1.msra.mxu0 0.0
    %345 = vmatprep.subr.mxu0 0.0
    %346 = vmatpush1.msra.mxu0 0.0
    %347 = vmatprep.subr.mxu0 0.0
    %348 = vmatpush1.msra.mxu0 0.0
    %349 = vmatprep.subr.mxu0 0.0
    %350 = vmatpush1.msra.mxu0 0.0
    %351 = vmatprep.subr.mxu0 0.0
    %352 = vmatpush1.msra.mxu0 0.0
    %353 = vmatprep.subr.mxu0 0.0
    %354 = vmatpush1.msra.mxu0 0.0
    %355 = vmatprep.subr.mxu0 0.0
    %356 = vmatpush1.msra.mxu0 0.0
    %357 = vmatprep.subr.mxu0 0.0
    %358 = vmatpush1.msra.mxu0 0.0
    %359 = vmatprep.subr.mxu0 0.0
    %360 = vmatpush1.msra.mxu0 0.0
    %361 = vmatprep.subr.mxu0 0.0
    %362 = vmatpush1.msra.mxu0 0.0
    %363 = vmatprep.subr.mxu0 0.0
    %364 = vmatpush1.msra.mxu0 0.0
    %365 = vmatprep.subr.mxu0 0.0
    %366 = vmatpush1.msra.mxu0 0.0
    %367 = vmatprep.subr.mxu0 0.0
    %368 = vmatpush1.msra.mxu0 0.0
    %369 = vmatprep.subr.mxu0 0.0
    %370 = vmatpush1.msra.mxu0 %v119
    %371 = vmatprep.subr.mxu0 0.0
    %372 = vmatpush1.msra.mxu0 %v118
    %373 = vmatprep.subr.mxu0 0.0
    %374 = vmatpush2.msra.mxu0 0.0
    %375 = vmatprep.subr.mxu0 0.0
    %376 = vmatpush2.msra.mxu0 0.0
    %377 = vmatprep.subr.mxu0 0.0
    %378 = vmatpush2.msra.mxu0 0.0
    %379 = vmatprep.subr.mxu0 0.0
    %380 = vmatpush2.msra.mxu0 0.0
    %381 = vmatprep.subr.mxu0 0.0
    %382 = vmatpush2.msra.mxu0 0.0
    %383 = vmatprep.subr.mxu0 0.0
    %384 = vmatpush2.msra.mxu0 0.0
    %385 = vmatprep.subr.mxu0 0.0
    %386 = vmatpush2.msra.mxu0 0.0
    %387 = vmatprep.subr.mxu0 0.0
    %388 = vmatpush2.msra.mxu0 0.0
    %389 = vmatprep.subr.mxu0 0.0
    %390 = vmatpush2.msra.mxu0 0.0
    %391 = vmatprep.subr.mxu0 0.0
    %392 = vmatpush2.msra.mxu0 0.0
    %393 = vmatprep.subr.mxu0 0.0
    %394 = vmatpush2.msra.mxu0 0.0
    %395 = vmatprep.subr.mxu0 0.0
    %396 = vmatpush2.msra.mxu0 0.0
    %397 = vmatprep.subr.mxu0 0.0
    %398 = vmatpush2.msra.mxu0 0.0
    %399 = vmatprep.subr.mxu0 0.0
    %400 = vmatpush2.msra.mxu0 0.0
    %401 = vmatprep.subr.mxu0 0.0
    %402 = vmatpush2.msra.mxu0 0.0
    %403 = vmatprep.subr.mxu0 0.0
    %404 = vmatpush2.msra.mxu0 0.0
    %405 = vmatprep.mubr.f32.mxu0 0.0
    %406 = vmatmul.mubr.f32.gmra.mxu0 %v129
    %v407 = vpop.f32.mrf.mxu0
    %v408 = vadd.f32 %v338, %v407
    %v409 = vpop.f32.mrf.mxu0
    %410 = vdwg.mxu0
    %vm411 = vcmask 80896
    %412 = vst.msk [vmem:[#allocation2] sm:$0xff] %vm411, %v408
    // Predicated region
    $region14: #{tpu_custom_call.1} parent=1 // pred_check
      _
    $region15: #{tpu_custom_call.1} parent=1 // pred_check_branch
      %414 = sbr.rel (0) target = $region17
    $region16: #{tpu_custom_call.1} parent=1 // pred_region
      %s416 = ssub.s32 128, 128
      %417 = vsyncadd [#allocation3], %s416
      %s419 = sshll.u32 [#allocation2], 4
      %s420 = int_to_ptr.vmem [resolvable:$true] %s419
      %422 = dma.vmem_to_hbm [thread:$0]  %s420, 128, %s3, [#allocation3]
    $region17: #{tpu_custom_call.1} parent=1 // pred_fallthru
      _
    // Predicated region
    $region18: #{tpu_custom_call.1} parent=1 // pred_check
      _
    $region19: #{tpu_custom_call.1} parent=1 // pred_check_branch
      %424 = sbr.rel (0) target = $region21
    $region20: #{tpu_custom_call.1} parent=1 // pred_region
      %425 = dma.done [#allocation3], 128
    $region21: #{tpu_custom_call.1} parent=1 // pred_fallthru
      _
    %426 = vsyncpa [#allocation3], 1

</llo_original>
